<compile_context>
chip_gen: v7x
topology: tpu7x:2x2x1
jax: 0.10.0
libtpu: 0.0.40
codegen_flags: <defaults>
</compile_context>

<pallas_src>
import functools
import math

import jax
import jax.numpy as jnp
from jax.experimental import pallas as pl
from jax.experimental.pallas import tpu as pltpu


def _bf16_eup_ok():
    """bf16 VPU/EUP path exists on v6e / v7x; not on v5e and older."""
    try:
        kind = jax.devices()[0].device_kind.lower()
    except Exception:
        return False
    return any(tag in kind for tag in ("v6", "v7", "7x"))


def _choose_block_batch(B, HW, Cin, Clat, *, max_block_bytes=8 << 20):
    """Pick how many samples each grid step processes (BB)."""
    # Per-sample VMEM inside one step: double-buffered bf16 activation tile
    # + f32 conv1x1 intermediate.
    per_sample = 2 * HW * Cin * 2 + HW * Clat * 4
    bb = max(1, max_block_bytes // per_sample)
    # v7x has 2 TensorCores: keep >= 2 grid steps so "parallel" actually
    # shards work across them (costs nothing on v5e/v6e).
    bb = min(bb, max(1, B // 2))
    # Prefer BB*HW a multiple of 128: exactly fills the 128-row v5e MXU
    # (and half the 256-row v6e/v7x MXU).
    if HW % 128:
        step = 128 // math.gcd(HW, 128)
        if bb >= step:
            bb = (bb // step) * step
    # BB must divide B so every grid step sees a full block.
    bb = max(1, min(bb, B))
    while B % bb:
        bb -= 1
    return bb


def _make_head_kernel(pool_method, add_fc_block, eps, BB, HW, use_bf16_pow):
    """Build the per-block head kernel (static config baked in)."""

    def kernel(*refs):
        i = 0
        if pool_method == "gem":
            p_ref = refs[i]
            i += 1
        x_ref, w1_ref, b1_ref = refs[i:i + 3]
        i += 3
        if add_fc_block:
            wfc_ref, bfc_ref = refs[i:i + 2]
            i += 2
        out_ref = refs[i]

        Cin = x_ref.shape[-1]
        Clat = w1_ref.shape[-1]

        # fh_conv1x1: 1x1 conv == channel matmul on the MXU (bf16 x bf16 -> f32).
        if HW % 8 == 0:
            # Fold (BB, HW) into one sublane axis -> one big MXU matmul.
            h = jnp.dot(x_ref[...].reshape(BB * HW, Cin), w1_ref[...],
                        preferred_element_type=jnp.float32
                        ).reshape(BB, HW, Clat)
        else:
            # HW not sublane-aligned: keep per-sample batching (batched dot).
            h = jnp.einsum("shc,cd->shd", x_ref[...], w1_ref[...],
                           preferred_element_type=jnp.float32)

        if pool_method == "gem":
            p = p_ref[0]                                     # GeM exponent (SMEM)
            hc = jnp.maximum(h + b1_ref[...], eps)           # bias BEFORE clamp/pow
            if use_bf16_pow:
                # bf16 EUP path (v6e/v7x): ~2x transcendental throughput,
                # half the vreg/VMEM pressure for the (BB, HW, Clat) tensor.
                hc = hc.astype(jnp.bfloat16)
                hp = jnp.exp(jnp.log(hc) * p.astype(jnp.bfloat16))
            else:
                hp = jnp.exp(jnp.log(hc) * p)                # f32 (v5e-safe)
            # Accumulate the spatial mean in f32.
            pooled = jnp.sum(hp.astype(jnp.float32), axis=1) * (1.0 / HW)
            pooled = jnp.exp(jnp.log(pooled) * (1.0 / p))    # (BB, Clat)
        elif pool_method == "spoc":
            # mean commutes with a per-channel constant: add bias after pooling.
            pooled = jnp.mean(h, axis=1) + b1_ref[...]
        elif pool_method == "max":
            pooled = jnp.max(h, axis=1) + b1_ref[...]
        else:
            raise NotImplementedError(pool_method)

        if add_fc_block:
            out = jnp.dot(pooled.astype(wfc_ref.dtype), wfc_ref[...],
                          preferred_element_type=jnp.float32) + bfc_ref[...]
        else:
            out = pooled
        out_ref[...] = out[:, None, :].astype(out_ref.dtype)  # (BB, 1, O)

    return kernel


def pack_backbone_features(feat_nchw):
    """NCHW f32 -> (B, HW, Cin) bf16 (channels lane-dense).

    One fused transpose+cast pass.  In a full JAX port the backbone emits
    channels-last features directly and this pass disappears (fold the bf16
    cast into the backbone's last op)."""
    B, C, H, W = feat_nchw.shape
    return (jnp.transpose(feat_nchw, (0, 2, 3, 1))
            .reshape(B, H * W, C).astype(jnp.bfloat16))


def general_fpn_head(x, params, *, pool_method="gem", add_fc_block=True,
                     eps=1e-6, block_batch=None, use_bf16_pow=None,
                     act_buffers=2):
    """GeneralFPN head: 1x1 lateral conv + GeM/SPoC/Max pooling (+ optional fc).

    x: (B, HW, Cin) channels-last feature map (bf16 preferred) from the
       (external) backbone.  Returns (B, out_channels) float32 embedding.
    """
    B, HW, Cin = x.shape
    x = x.astype(jnp.bfloat16)
    w1 = params["conv_w"]            # (Cin, Clat) bf16 (pre-packed once)
    b1 = params["conv_b"]            # (1, Clat)   f32
    Clat = w1.shape[1]
    if add_fc_block:
        wfc = params["fc_w"]         # (Clat, O) bf16
        bfc = params["fc_b"]         # (1, O)    f32
        O = wfc.shape[1]
    else:
        O = Clat

    if use_bf16_pow is None:
        use_bf16_pow = _bf16_eup_ok()
    BB = block_batch if block_batch is not None else _choose_block_batch(
        B, HW, Cin, Clat)
    assert B % BB == 0, (B, BB)

    kernel = _make_head_kernel(pool_method, add_fc_block, eps, BB, HW,
                               use_bf16_pow)

    in_specs = []
    args = []
    if pool_method == "gem":
        in_specs.append(pl.BlockSpec(memory_space=pltpu.MemorySpace.SMEM))
        args.append(params["gem_p"].reshape(1).astype(jnp.float32))

    if act_buffers > 2:
        act_spec = pl.BlockSpec((BB, HW, Cin), lambda b: (b, 0, 0),
                                pipeline_mode=pl.Buffered(act_buffers))
    else:
        act_spec = pl.BlockSpec((BB, HW, Cin), lambda b: (b, 0, 0))
    in_specs += [
        act_spec,                                            # activations (batch-tiled)
        pl.BlockSpec((Cin, Clat), lambda b: (0, 0)),         # conv weight (VMEM-resident)
        pl.BlockSpec((1, Clat), lambda b: (0, 0)),           # conv bias   (VMEM-resident)
    ]
    args += [x, w1, b1]
    if add_fc_block:
        in_specs += [
            pl.BlockSpec((Clat, O), lambda b: (0, 0)),       # fc weight (VMEM-resident)
            pl.BlockSpec((1, O), lambda b: (0, 0)),          # fc bias   (VMEM-resident)
        ]
        args += [wfc, bfc]

    # VMEM budget: pipelined activation buffers + f32 intermediate + resident
    # weights + output blocks, with headroom; capped at v7x's 64 MiB physical.
    act_block = BB * HW * Cin * 2
    inter = BB * HW * Clat * 4
    wbytes = Cin * Clat * 2 + Clat * 4 + (Clat * O * 2 + O * 4 if add_fc_block else 0)
    out_block = BB * O * 4
    vmem_est = max(2, act_buffers) * act_block + 2 * out_block + 2 * wbytes + inter
    vmem_limit = int(min(64 << 20, max(32 << 20, 2 * vmem_est + (4 << 20))))

    flops = 2 * B * HW * Cin * Clat + (2 * B * Clat * O if add_fc_block else 0)
    transcendentals = (2 * B * HW * Clat + 2 * B * Clat) if pool_method == "gem" else 0
    bytes_accessed = (B * HW * Cin * 2 + wbytes + B * O * 4
                      + (4 if pool_method == "gem" else 0))

    out = pl.pallas_call(
        kernel,
        out_shape=jax.ShapeDtypeStruct((B, 1, O), jnp.float32),
        grid=(B // BB,),
        in_specs=in_specs,
        out_specs=pl.BlockSpec((BB, 1, O), lambda b: (b, 0, 0)),
        compiler_params=pltpu.CompilerParams(
            dimension_semantics=("parallel",),
            vmem_limit_bytes=vmem_limit),
        cost_estimate=pl.CostEstimate(
            flops=flops, transcendentals=transcendentals,
            bytes_accessed=bytes_accessed),
    )(*args)
    return out.reshape(B, O)


def init_params(key, c_in, lateral_dim, out_channels, *, p_init=3.0,
                add_fc_block=True):
    """Master f32 params in matmul layout + kernel-ready bf16 copies
    (prepacked ONCE here, not on every forward call)."""
    ks = jax.random.split(key, 4)
    conv_w = jax.random.normal(ks[0], (c_in, lateral_dim), jnp.float32) * 0.02
    conv_b = jax.random.normal(ks[1], (1, lateral_dim), jnp.float32) * 0.01
    params = {
        "conv_w_f32": conv_w,
        "conv_b": conv_b,
        "conv_w": conv_w.astype(jnp.bfloat16),
        "gem_p": jnp.array([p_init], jnp.float32),
    }
    if add_fc_block:
        fc_w = jax.random.normal(ks[2], (lateral_dim, out_channels), jnp.float32) * 0.02
        fc_b = jax.random.normal(ks[3], (1, out_channels), jnp.float32) * 0.01
        params.update({
            "fc_w_f32": fc_w,
            "fc_b": fc_b,
            "fc_w": fc_w.astype(jnp.bfloat16),
        })
    return params


def _reference(feat, params, *, pool_method="gem", add_fc_block=True, eps=1e-6):
    """Pure-JAX f32 mirror of GeneralFPN's head (conv1x1 + pool + optional fc)."""
    B, Cin, H, W = feat.shape
    x = jnp.transpose(feat, (0, 2, 3, 1)).reshape(B, H * W, Cin)
    h = x @ params["conv_w_f32"] + params["conv_b"]
    if pool_method == "gem":
        p = params["gem_p"][0]
        pooled = jnp.mean(jnp.maximum(h, eps) ** p, axis=1) ** (1.0 / p)
    elif pool_method == "spoc":
        pooled = jnp.mean(h, axis=1)
    elif pool_method == "max":
        pooled = jnp.max(h, axis=1)
    else:
        raise NotImplementedError(pool_method)
    if add_fc_block:
        return pooled @ params["fc_w_f32"] + params["fc_b"]
    return pooled


if __name__ == "__main__":
    key = jax.random.PRNGKey(0)
    # Small demo shapes consistent with the module: backbone feature map
    # (B, C_in, H, W) -> lateral_dim -> out_channels.
    B, Cin, H, W = 2, 256, 8, 8
    lateral_dim = 128
    out_channels = 128
    add_fc_block = True

    k1, k2 = jax.random.split(key)
    feat = jax.random.normal(k1, (B, Cin, H, W), jnp.float32)
    params = init_params(k2, Cin, lateral_dim, out_channels,
                         add_fc_block=add_fc_block)

    head = functools.partial(general_fpn_head, pool_method="gem",
                             add_fc_block=add_fc_block)

    @jax.jit
    def fwd(feat_nchw, prm):
        # Stand-in for the (external) backbone emitting channels-last features:
        # one fused transpose+cast pass, then the Pallas head.
        return head(pack_backbone_features(feat_nchw), prm)

    emb = jax.block_until_ready(fwd(feat, params))
    assert emb.shape == (B, out_channels), emb.shape

    ref = _reference(feat, params, pool_method="gem", add_fc_block=add_fc_block)
    # bf16 matmul operands (and bf16 GeM pow on v6e/v7x) with f32 accumulation
    # -> loose-but-tight-enough tolerance.
    max_err = float(jnp.max(jnp.abs(emb - ref)))
    assert jnp.allclose(emb, ref, atol=2e-2, rtol=3e-2), max_err

    print("KERNEL_OK")
</pallas_src>

<mosaic_0001>
module attributes {stable_mosaic.version = 11 : i64} {
  func.func @kernel(%arg0: i32, %arg1: memref<1xf32, #tpu.memory_space<smem>>, %arg2: memref<1x64x256xbf16, #tpu.memory_space<vmem>>, %arg3: memref<256x128xbf16, #tpu.memory_space<vmem>>, %arg4: memref<1x128xf32, #tpu.memory_space<vmem>>, %arg5: memref<128x128xbf16, #tpu.memory_space<vmem>>, %arg6: memref<1x128xf32, #tpu.memory_space<vmem>>, %arg7: memref<1x1x128xf32, #tpu.memory_space<vmem>>) attributes {dimension_semantics = [#tpu.dimension_semantics<parallel>], iteration_bounds = array<i64: 2>, scalar_prefetch = 0 : i64, scratch_operands = 0 : i64, tpu.core_type = #tpu.core_type<tc>, window_params = [{transform_indices = @transform_0, window_bounds = array<i64: 1>}, {transform_indices = @transform_1, window_bounds = array<i64: 1, 64, 256>}, {pipeline_mode = #tpu.pipeline_mode<synchronous>, transform_indices = @transform_2, window_bounds = array<i64: 256, 128>}, {pipeline_mode = #tpu.pipeline_mode<synchronous>, transform_indices = @transform_3, window_bounds = array<i64: 1, 128>}, {pipeline_mode = #tpu.pipeline_mode<synchronous>, transform_indices = @transform_4, window_bounds = array<i64: 128, 128>}, {pipeline_mode = #tpu.pipeline_mode<synchronous>, transform_indices = @transform_5, window_bounds = array<i64: 1, 128>}, {transform_indices = @transform_6, window_bounds = array<i64: 1, 1, 128>}]} {
    %c0 = arith.constant 0 : index
    %c0_0 = arith.constant 0 : index
    %c0_1 = arith.constant 0 : index
    %0 = vector.load %arg2[%c0, %c0_0, %c0_1] : memref<1x64x256xbf16, #tpu.memory_space<vmem>>, vector<1x64x256xbf16>
    %1 = vector.shape_cast %0 : vector<1x64x256xbf16> to vector<64x256xbf16>
    %c0_2 = arith.constant 0 : index
    %c0_3 = arith.constant 0 : index
    %2 = vector.load %arg3[%c0_2, %c0_3] : memref<256x128xbf16, #tpu.memory_space<vmem>>, vector<256x128xbf16>
    %cst = arith.constant dense<0.000000e+00> : vector<64x128xf32>
    %3 = tpu.matmul %1, %2, %cst {dimension_numbers = #tpu.dot_dimension_numbers<[1], [0], [0], [1], [0, 0, 1, 1], [], []>} : vector<64x256xbf16>, vector<256x128xbf16>, vector<64x128xf32> -> vector<64x128xf32>
    %4 = vector.shape_cast %3 : vector<64x128xf32> to vector<1x64x128xf32>
    %c0_4 = arith.constant 0 : index
    %5 = memref.load %arg1[%c0_4] : memref<1xf32, #tpu.memory_space<smem>>
    %c0_5 = arith.constant 0 : index
    %c0_6 = arith.constant 0 : index
    %6 = vector.load %arg4[%c0_5, %c0_6] : memref<1x128xf32, #tpu.memory_space<vmem>>, vector<1x128xf32>
    %7 = vector.shape_cast %6 : vector<1x128xf32> to vector<1x1x128xf32>
    %8 = vector.broadcast %7 : vector<1x1x128xf32> to vector<1x64x128xf32>
    %9 = arith.addf %4, %8 : vector<1x64x128xf32>
    %cst_7 = arith.constant 9.99999997E-7 : f32
    %10 = vector.broadcast %cst_7 : f32 to vector<1x64x128xf32>
    %11 = arith.maximumf %9, %10 : vector<1x64x128xf32>
    %12 = math.log %11 : vector<1x64x128xf32>
    %13 = vector.broadcast %5 : f32 to vector<1x64x128xf32>
    %14 = arith.mulf %12, %13 : vector<1x64x128xf32>
    %15 = math.exp %14 : vector<1x64x128xf32>
    %cst_8 = arith.constant dense<0.000000e+00> : vector<1x128xf32>
    %16 = vector.multi_reduction <add>, %15, %cst_8 [1] : vector<1x64x128xf32> to vector<1x128xf32>
    %cst_9 = arith.constant 1.562500e-02 : f32
    %17 = vector.broadcast %cst_9 : f32 to vector<1x128xf32>
    %18 = arith.mulf %16, %17 : vector<1x128xf32>
    %19 = math.log %18 : vector<1x128xf32>
    %cst_10 = arith.constant 1.000000e+00 : f32
    %20 = arith.divf %cst_10, %5 : f32
    %21 = vector.broadcast %20 : f32 to vector<1x128xf32>
    %22 = arith.mulf %19, %21 : vector<1x128xf32>
    %23 = math.exp %22 : vector<1x128xf32>
    %24 = arith.truncf %23 : vector<1x128xf32> to vector<1x128xbf16>
    %c0_11 = arith.constant 0 : index
    %c0_12 = arith.constant 0 : index
    %25 = vector.load %arg5[%c0_11, %c0_12] : memref<128x128xbf16, #tpu.memory_space<vmem>>, vector<128x128xbf16>
    %cst_13 = arith.constant dense<0.000000e+00> : vector<1x128xf32>
    %26 = tpu.matmul %24, %25, %cst_13 {dimension_numbers = #tpu.dot_dimension_numbers<[1], [0], [0], [1], [0, 0, 1, 1], [], []>} : vector<1x128xbf16>, vector<128x128xbf16>, vector<1x128xf32> -> vector<1x128xf32>
    %c0_14 = arith.constant 0 : index
    %c0_15 = arith.constant 0 : index
    %27 = vector.load %arg6[%c0_14, %c0_15] : memref<1x128xf32, #tpu.memory_space<vmem>>, vector<1x128xf32>
    %28 = arith.addf %26, %27 : vector<1x128xf32>
    %29 = vector.shape_cast %28 : vector<1x128xf32> to vector<1x1x128xf32>
    %c0_16 = arith.constant 0 : index
    %c0_17 = arith.constant 0 : index
    %c0_18 = arith.constant 0 : index
    %30 = vector.load %arg7[%c0_16, %c0_17, %c0_18] : memref<1x1x128xf32, #tpu.memory_space<vmem>>, vector<1x1x128xf32>
    tpu.vector_store %arg7[%c0_16, %c0_17, %c0_18], %29 {strides = array<i32>} : memref<1x1x128xf32, #tpu.memory_space<vmem>>, vector<1x1x128xf32>,
    return
  }
  func.func @transform_0(%arg0: i32) -> i32 {
    %c0_i32 = arith.constant 0 : i32
    %c0_i32_0 = arith.constant 0 : i32
    return %c0_i32 : i32
  }
  func.func @transform_1(%arg0: i32) -> (i32, i32, i32) {
    %c0_i32 = arith.constant 0 : i32
    %c0_i32_0 = arith.constant 0 : i32
    %c0_i32_1 = arith.constant 0 : i32
    return %arg0, %c0_i32, %c0_i32_0 : i32, i32, i32
  }
  func.func @transform_2(%arg0: i32) -> (i32, i32) {
    %c0_i32 = arith.constant 0 : i32
    %c0_i32_0 = arith.constant 0 : i32
    %c0_i32_1 = arith.constant 0 : i32
    return %c0_i32, %c0_i32_0 : i32, i32
  }
  func.func @transform_3(%arg0: i32) -> (i32, i32) {
    %c0_i32 = arith.constant 0 : i32
    %c0_i32_0 = arith.constant 0 : i32
    %c0_i32_1 = arith.constant 0 : i32
    return %c0_i32, %c0_i32_0 : i32, i32
  }
  func.func @transform_4(%arg0: i32) -> (i32, i32) {
    %c0_i32 = arith.constant 0 : i32
    %c0_i32_0 = arith.constant 0 : i32
    %c0_i32_1 = arith.constant 0 : i32
    return %c0_i32, %c0_i32_0 : i32, i32
  }
  func.func @transform_5(%arg0: i32) -> (i32, i32) {
    %c0_i32 = arith.constant 0 : i32
    %c0_i32_0 = arith.constant 0 : i32
    %c0_i32_1 = arith.constant 0 : i32
    return %c0_i32, %c0_i32_0 : i32, i32
  }
  func.func @transform_6(%arg0: i32) -> (i32, i32, i32) {
    %c0_i32 = arith.constant 0 : i32
    %c0_i32_0 = arith.constant 0 : i32
    %c0_i32_1 = arith.constant 0 : i32
    return %arg0, %c0_i32, %c0_i32_0 : i32, i32, i32
  }
}

</mosaic_0001>

<llo_original>
// kernel: fwd.1
$region0: #{fwd.1}
  #allocation0 [shape = 'u32[]', space=smem, size = 0x4, offset = 0x4, fixed_abs, tag = 'smem constant byte address 0x4 - core index']
  #allocation1 [shape = 'u32[144,128]{1,0:T(1,128)}', space=vmem, size = 0x12000, scoped, tag = 'internal scratch']
  #allocation2 [shape = 'f32[1]{0:T(128)S(6)}', space=smem, size = 0x200, scoped, tag = 'scoped memory for fwd.1']
  %s0 = inlined_call_operand.<no memory space> [shape: f32[1], index: 0, kind: input, shape index: {}]
  %s1 = inlined_call_operand.vmem [shape: bf16[2,64,256], index: 1, kind: input, shape index: {}]
  %s2 = inlined_call_operand.vmem [shape: bf16[256,128], index: 2, kind: input, shape index: {}]
  %s3 = inlined_call_operand.vmem [shape: f32[1,128], index: 3, kind: input, shape index: {}]
  %s4 = inlined_call_operand.vmem [shape: bf16[128,128], index: 4, kind: input, shape index: {}]
  %s5 = inlined_call_operand.vmem [shape: f32[1,128], index: 5, kind: input, shape index: {}]
  %s6 = inlined_call_operand.hbm [shape: f32[2,1,128], index: 6, kind: output, shape index: {}]
  %s7 = sld [smem:[#allocation0]]
  $region57: #{fwd.1} parent=0
    _
  %s9 = ssub.s32 1, %s7
  %s10 = scalar_select 0, %s9, %s7
  %11 = sst [smem:[#allocation2]] %s0
  $region1: #{fwd.1} parent=0
    #allocation3 [shape = 'u8[1024]{0}', space=vmem, size = 0x400, scoped, tag = 'output window, operand 0']
    #allocation4 [shape = 's32[2]{0}', space=sflag, size = 0x8, scoped, tag = 'scoped memory for fwd.1']
    %12 = vsyncpa [#allocation4], 0
    %s13 = scalar_lea.sflag [#allocation4], 1
    %14 = vsyncpa %s13, 0
    loop: start=0, step=1, limit=4
    $region2: #{fwd.1} parent=1 // loop_pre_header
      _
    $region3: #{fwd.1} parent=1 // loop_header
      %s16 = sphi 0, %s20
      %p17 = scmp.ge.s32.totalorder %s16, 4
      %s24 = sphi 0, %s24
      %s26 = sphi 0, %s24
      %s27 = sphi 0, %s26
      %s41 = sphi 0, %s27
      %s47 = sphi 0, %s49
      %s50 = sphi 0, %s47
      %s51 = sphi 0, %s50
      %s67 = sphi 0, %s51
      %s71 = sphi 0, %s71
      %s73 = sphi 0, %s71
      %s74 = sphi 0, %s73
      %s88 = sphi 0, %s74
      %s92 = sphi 0, %s92
      %s94 = sphi 0, %s92
      %s95 = sphi 0, %s94
      %s109 = sphi 0, %s95
      %s113 = sphi 0, %s113
      %s115 = sphi 0, %s113
      %s116 = sphi 0, %s115
      %s130 = sphi 0, %s116
      %s134 = sphi 0, %s134
      %s136 = sphi 0, %s134
      %s137 = sphi 0, %s136
      %s151 = sphi 0, %s137
      %s157 = sphi 0, %s159
      %s160 = sphi 0, %s157
      %s161 = sphi 0, %s160
      %s177 = sphi 0, %s161
    $region4: #{fwd.1} parent=1 // loop_header_branch
      %19 = sbr.rel (%p17) target = $region8
    $region5: #{fwd.1} parent=1 // loop_body
      %s21 = ssub.s32 %s16, 1
      %s22 = ssub.s32 %s16, 2
      %s23 = sadd.s32 %s16, 1
      %s25 = sadd.s32 %s24, 1
      %p28 = scmp.eq.s32.totalorder %s16, 1
      %p29 = scmp.ne.s32.totalorder %s24, %s26
      %p30 = scmp.eq.s32.totalorder %s16, 0
      %p31 = por %p29, %p30
      %p32 = scmp.ne.s32.totalorder %s24, %s26
      %p33 = scmp.eq.s32.totalorder %s21, 1
      %p34 = por %p32, %p33
      %p35 = scmp.ne.s32.totalorder %s26, %s27
      %p36 = scmp.eq.s32.totalorder %s21, 0
      %p37 = por %p35, %p36
      %p38 = scmp.ne.s32.totalorder %s26, %s27
      %p39 = scmp.eq.s32.totalorder %s22, 1
      %p40 = por %p38, %p39
      %p42 = scmp.ne.s32.totalorder %s27, %s41
      %p43 = scmp.eq.s32.totalorder %s22, 0
      %p44 = por %p42, %p43
      %s45 = ssub.s32 %s16, %s23
      %p46 = scmp.eq.s32.totalorder %s45, 0
      %s48 = sadd.s32 %s47, 1
      %s49 = scalar_select %p46, %s47, %s48
      %p52 = pneg %p46
      %p53 = scmp.eq.s32.totalorder %s16, 1
      %p54 = por %p52, %p53
      %p55 = scmp.ne.s32.totalorder %s47, %s50
      %p56 = scmp.eq.s32.totalorder %s16, 0
      %p57 = por %p55, %p56
      %p58 = scmp.ne.s32.totalorder %s47, %s50
      %p59 = scmp.eq.s32.totalorder %s21, 1
      %p60 = por %p58, %p59
      %p61 = scmp.ne.s32.totalorder %s50, %s51
      %p62 = scmp.eq.s32.totalorder %s21, 0
      %p63 = por %p61, %p62
      %p64 = scmp.ne.s32.totalorder %s50, %s51
      %p65 = scmp.eq.s32.totalorder %s22, 1
      %p66 = por %p64, %p65
      %p68 = scmp.ne.s32.totalorder %s51, %s67
      %p69 = scmp.eq.s32.totalorder %s22, 0
      %p70 = por %p68, %p69
      %s72 = sadd.s32 %s71, 1
      %p75 = scmp.eq.s32.totalorder %s16, 1
      %p76 = scmp.ne.s32.totalorder %s71, %s73
      %p77 = scmp.eq.s32.totalorder %s16, 0
      %p78 = por %p76, %p77
      %p79 = scmp.ne.s32.totalorder %s71, %s73
      %p80 = scmp.eq.s32.totalorder %s21, 1
      %p81 = por %p79, %p80
      %p82 = scmp.ne.s32.totalorder %s73, %s74
      %p83 = scmp.eq.s32.totalorder %s21, 0
      %p84 = por %p82, %p83
      %p85 = scmp.ne.s32.totalorder %s73, %s74
      %p86 = scmp.eq.s32.totalorder %s22, 1
      %p87 = por %p85, %p86
      %p89 = scmp.ne.s32.totalorder %s74, %s88
      %p90 = scmp.eq.s32.totalorder %s22, 0
      %p91 = por %p89, %p90
      %s93 = sadd.s32 %s92, 1
      %p96 = scmp.eq.s32.totalorder %s16, 1
      %p97 = scmp.ne.s32.totalorder %s92, %s94
      %p98 = scmp.eq.s32.totalorder %s16, 0
      %p99 = por %p97, %p98
      %p100 = scmp.ne.s32.totalorder %s92, %s94
      %p101 = scmp.eq.s32.totalorder %s21, 1
      %p102 = por %p100, %p101
      %p103 = scmp.ne.s32.totalorder %s94, %s95
      %p104 = scmp.eq.s32.totalorder %s21, 0
      %p105 = por %p103, %p104
      %p106 = scmp.ne.s32.totalorder %s94, %s95
      %p107 = scmp.eq.s32.totalorder %s22, 1
      %p108 = por %p106, %p107
      %p110 = scmp.ne.s32.totalorder %s95, %s109
      %p111 = scmp.eq.s32.totalorder %s22, 0
      %p112 = por %p110, %p111
      %s114 = sadd.s32 %s113, 1
      %p117 = scmp.eq.s32.totalorder %s16, 1
      %p118 = scmp.ne.s32.totalorder %s113, %s115
      %p119 = scmp.eq.s32.totalorder %s16, 0
      %p120 = por %p118, %p119
      %p121 = scmp.ne.s32.totalorder %s113, %s115
      %p122 = scmp.eq.s32.totalorder %s21, 1
      %p123 = por %p121, %p122
      %p124 = scmp.ne.s32.totalorder %s115, %s116
      %p125 = scmp.eq.s32.totalorder %s21, 0
      %p126 = por %p124, %p125
      %p127 = scmp.ne.s32.totalorder %s115, %s116
      %p128 = scmp.eq.s32.totalorder %s22, 1
      %p129 = por %p127, %p128
      %p131 = scmp.ne.s32.totalorder %s116, %s130
      %p132 = scmp.eq.s32.totalorder %s22, 0
      %p133 = por %p131, %p132
      %s135 = sadd.s32 %s134, 1
      %p138 = scmp.eq.s32.totalorder %s16, 1
      %p139 = scmp.ne.s32.totalorder %s134, %s136
      %p140 = scmp.eq.s32.totalorder %s16, 0
      %p141 = por %p139, %p140
      %p142 = scmp.ne.s32.totalorder %s134, %s136
      %p143 = scmp.eq.s32.totalorder %s21, 1
      %p144 = por %p142, %p143
      %p145 = scmp.ne.s32.totalorder %s136, %s137
      %p146 = scmp.eq.s32.totalorder %s21, 0
      %p147 = por %p145, %p146
      %p148 = scmp.ne.s32.totalorder %s136, %s137
      %p149 = scmp.eq.s32.totalorder %s22, 1
      %p150 = por %p148, %p149
      %p152 = scmp.ne.s32.totalorder %s137, %s151
      %p153 = scmp.eq.s32.totalorder %s22, 0
      %p154 = por %p152, %p153
      %s155 = ssub.s32 %s16, %s23
      %p156 = scmp.eq.s32.totalorder %s155, 0
      %s158 = sadd.s32 %s157, 1
      %s159 = scalar_select %p156, %s157, %s158
      %p162 = pneg %p156
      %p163 = scmp.eq.s32.totalorder %s16, 1
      %p164 = por %p162, %p163
      %p165 = scmp.ne.s32.totalorder %s157, %s160
      %p166 = scmp.eq.s32.totalorder %s16, 0
      %p167 = por %p165, %p166
      %p168 = scmp.ne.s32.totalorder %s157, %s160
      %p169 = scmp.eq.s32.totalorder %s21, 1
      %p170 = por %p168, %p169
      %p171 = scmp.ne.s32.totalorder %s160, %s161
      %p172 = scmp.eq.s32.totalorder %s21, 0
      %p173 = por %p171, %p172
      %p174 = scmp.ne.s32.totalorder %s160, %s161
      %p175 = scmp.eq.s32.totalorder %s22, 1
      %p176 = por %p174, %p175
      %p178 = scmp.ne.s32.totalorder %s161, %s177
      %p179 = scmp.eq.s32.totalorder %s22, 0
      %p180 = por %p178, %p179
      %p181 = scmp.le.s32.totalorder 1, %s16
      %p182 = scmp.lt.s32.totalorder %s16, 3
      %p183 = pnand %p181, %p182
      %p184 = pneg %p183
      // Predicated region
      $region9: #{fwd.1} parent=5 // pred_check
        _
      $region10: #{fwd.1} parent=5 // pred_check_branch
        %186 = sbr.rel (%p183) target = $region12
      $region11: #{fwd.1} parent=5 // pred_region
        %s187 = ssub.s32 %s16, 1
        // Predicated region
        $region13: #{fwd.1} parent=11 // pred_check
          %p188 = pneg %p37
        $region14: #{fwd.1} parent=11 // pred_check_branch
          %190 = sbr.rel (%p188) target = $region16
        $region15: #{fwd.1} parent=11 // pred_region
          _
        $region16: #{fwd.1} parent=11 // pred_fallthru
          _
        // Predicated region
        $region17: #{fwd.1} parent=11 // pred_check
          %p191 = pneg %p84
        $region18: #{fwd.1} parent=11 // pred_check_branch
          %193 = sbr.rel (%p191) target = $region20
        $region19: #{fwd.1} parent=11 // pred_region
          _
        $region20: #{fwd.1} parent=11 // pred_fallthru
          _
        // Predicated region
        $region21: #{fwd.1} parent=11 // pred_check
          %p194 = pneg %p105
        $region22: #{fwd.1} parent=11 // pred_check_branch
          %196 = sbr.rel (%p194) target = $region24
        $region23: #{fwd.1} parent=11 // pred_region
          _
        $region24: #{fwd.1} parent=11 // pred_fallthru
          _
        // Predicated region
        $region25: #{fwd.1} parent=11 // pred_check
          %p197 = pneg %p126
        $region26: #{fwd.1} parent=11 // pred_check_branch
          %199 = sbr.rel (%p197) target = $region28
        $region27: #{fwd.1} parent=11 // pred_region
          _
        $region28: #{fwd.1} parent=11 // pred_fallthru
          _
        // Predicated region
        $region29: #{fwd.1} parent=11 // pred_check
          %p200 = pneg %p147
        $region30: #{fwd.1} parent=11 // pred_check_branch
          %202 = sbr.rel (%p200) target = $region32
        $region31: #{fwd.1} parent=11 // pred_region
          _
        $region32: #{fwd.1} parent=11 // pred_fallthru
          _
      $region12: #{fwd.1} parent=5 // pred_fallthru
        _
      %p203 = scmp.lt.s32.totalorder %s16, 2
      // Predicated region
      $region33: #{fwd.1} parent=5 // pred_check
        %p204 = pneg %p203
      $region34: #{fwd.1} parent=5 // pred_check_branch
        %206 = sbr.rel (%p204) target = $region36
      $region35: #{fwd.1} parent=5 // pred_region
        // Predicated region
        $region37: #{fwd.1} parent=35 // pred_check
          %p207 = pneg %p57
        $region38: #{fwd.1} parent=35 // pred_check_branch
          %209 = sbr.rel (%p207) target = $region40
        $region39: #{fwd.1} parent=35 // pred_region
          %p210 = scmp.lt.s32.totalorder %s16, 1
          %s211 = scalar_select %p210, %s16, 1
          %s212 = smul.addr %s211, 16
          %s213 = smul.addr %s212, 4
          %s214 = scalar_lea.vmem %s1, %s213
        $region40: #{fwd.1} parent=35 // pred_fallthru
          _
      $region36: #{fwd.1} parent=5 // pred_fallthru
        _
      %p215 = scmp.le.s32.totalorder 1, %s16
      %p216 = scmp.lt.s32.totalorder %s16, 3
      %p217 = pnand %p215, %p216
      %p218 = pneg %p217
      // Predicated region
      $region41: #{fwd.1} parent=5 // pred_check
        _
      $region42: #{fwd.1} parent=5 // pred_check_branch
        %220 = sbr.rel (%p217) target = $region44
      $region43: #{fwd.1} parent=5 // pred_region
        %s221 = ssub.s32 %s16, 1
        %p222 = pneg %p37
        %p223 = pneg %p34
        %p224 = scmp.lt.s32.totalorder %s21, 1
        %s225 = scalar_select %p224, %s21, 1
        %s226 = smul.addr %s225, 16
        %s227 = smul.addr %s226, 4
        %s228 = scalar_lea.vmem %s1, %s227
        %p229 = pneg %p63
        %p230 = pneg %p60
        %p231 = pneg %p84
        %p232 = pneg %p81
        %p233 = pneg %p105
        %p234 = pneg %p102
        %p235 = pneg %p126
        %p236 = pneg %p123
        %p237 = pneg %p147
        %p238 = pneg %p144
        %p239 = pneg %p173
        %p240 = pneg %p170
        %s241 = sand.u32 %s160, 1
        %s242 = scalar_lea.sflag [#allocation4], %s241
        %s243 = sand.u32 %s160, 1
        %s244 = scalar_lea.vmem [#allocation3], %s243
        %p245 = scmp.lt.s32.totalorder %s21, 1
        %s246 = scalar_select %p245, %s21, 1
        %s247 = smul.addr %s246, 16
        %s248 = smul.addr %s247, 4
        %s249 = scalar_lea.vmem %s1, %s248
        %v251 = vld [vmem:[%s249] sm:$0xff]
        %v252 = vld [vmem:[%s249 + $0x8] sm:$0xff]
        %v253 = vld [vmem:[%s249 + $0x10] sm:$0xff]
        %v254 = vld [vmem:[%s249 + $0x18] sm:$0xff]
        %v255 = vld [vmem:[%s249 + $0x20] sm:$0xff]
        %v256 = vld [vmem:[%s249 + $0x28] sm:$0xff]
        %v257 = vld [vmem:[%s249 + $0x30] sm:$0xff]
        %v258 = vld [vmem:[%s249 + $0x38] sm:$0xff]
        %v259 = vld [vmem:[%s2] sm:$0xf]
        %v260 = vld [vmem:[%s2 + $0x4] sm:$0xf]
        %v261 = vld [vmem:[%s2 + $0x8] sm:$0xf]
        %v262 = vld [vmem:[%s2 + $0xc] sm:$0xf]
        %v263 = vld [vmem:[%s2 + $0x10] sm:$0xf]
        %v264 = vld [vmem:[%s2 + $0x14] sm:$0xf]
        %v265 = vld [vmem:[%s2 + $0x18] sm:$0xf]
        %v266 = vld [vmem:[%s2 + $0x1c] sm:$0xf]
        %v267 = vld [vmem:[%s2 + $0x20] sm:$0xf]
        %v268 = vld [vmem:[%s2 + $0x24] sm:$0xf]
        %v269 = vld [vmem:[%s2 + $0x28] sm:$0xf]
        %v270 = vld [vmem:[%s2 + $0x2c] sm:$0xf]
        %v271 = vld [vmem:[%s2 + $0x30] sm:$0xf]
        %v272 = vld [vmem:[%s2 + $0x34] sm:$0xf]
        %v273 = vld [vmem:[%s2 + $0x38] sm:$0xf]
        %v274 = vld [vmem:[%s2 + $0x3c] sm:$0xf]
        %v275 = vld [vmem:[%s2 + $0x40] sm:$0xf]
        %v276 = vld [vmem:[%s2 + $0x44] sm:$0xf]
        %v277 = vld [vmem:[%s2 + $0x48] sm:$0xf]
        %v278 = vld [vmem:[%s2 + $0x4c] sm:$0xf]
        %v279 = vld [vmem:[%s2 + $0x50] sm:$0xf]
        %v280 = vld [vmem:[%s2 + $0x54] sm:$0xf]
        %v281 = vld [vmem:[%s2 + $0x58] sm:$0xf]
        %v282 = vld [vmem:[%s2 + $0x5c] sm:$0xf]
        %v283 = vld [vmem:[%s2 + $0x60] sm:$0xf]
        %v284 = vld [vmem:[%s2 + $0x64] sm:$0xf]
        %v285 = vld [vmem:[%s2 + $0x68] sm:$0xf]
        %v286 = vld [vmem:[%s2 + $0x6c] sm:$0xf]
        %v287 = vld [vmem:[%s2 + $0x70] sm:$0xf]
        %v288 = vld [vmem:[%s2 + $0x74] sm:$0xf]
        %v289 = vld [vmem:[%s2 + $0x78] sm:$0xf]
        %v290 = vld [vmem:[%s2 + $0x7c] sm:$0xf]
        %v299 = vunpack.c.l.b16 %v251
        %v300 = vunpack.c.h.b16 %v251
        %v301 = vunpack.c.l.b16 %v252
        %v302 = vunpack.c.h.b16 %v252
        %v303 = vunpack.c.l.b16 %v253
        %v304 = vunpack.c.h.b16 %v253
        %v305 = vunpack.c.l.b16 %v254
        %v306 = vunpack.c.h.b16 %v254
        %v307 = vunpack.c.l.b16 %v255
        %v308 = vunpack.c.h.b16 %v255
        %v309 = vunpack.c.l.b16 %v256
        %v310 = vunpack.c.h.b16 %v256
        %v311 = vunpack.c.l.b16 %v257
        %v312 = vunpack.c.h.b16 %v257
        %v313 = vunpack.c.l.b16 %v258
        %v314 = vunpack.c.h.b16 %v258
        %v315 = vpack.c.b16 %v301, %v299
        %v316 = vpack.c.b16 %v302, %v300
        %v317 = vpack.c.b16 %v305, %v303
        %v318 = vpack.c.b16 %v306, %v304
        %v319 = vpack.c.b16 %v309, %v307
        %v320 = vpack.c.b16 %v310, %v308
        %v321 = vpack.c.b16 %v313, %v311
        %v322 = vpack.c.b16 %v314, %v312
        %v363 = vunpack.c.l.b16 %v259
        %v364 = vunpack.c.l.b16 %v260
        %v365 = vunpack.c.l.b16 %v261
        %v366 = vunpack.c.l.b16 %v262
        %v367 = vunpack.c.l.b16 %v263
        %v368 = vunpack.c.l.b16 %v264
        %v369 = vunpack.c.l.b16 %v265
        %v370 = vunpack.c.l.b16 %v266
        %v371 = vunpack.c.l.b16 %v267
        %v372 = vunpack.c.l.b16 %v268
        %v373 = vunpack.c.l.b16 %v269
        %v374 = vunpack.c.l.b16 %v270
        %v375 = vunpack.c.l.b16 %v271
        %v376 = vunpack.c.l.b16 %v272
        %v377 = vunpack.c.l.b16 %v273
        %v378 = vunpack.c.l.b16 %v274
        %v379 = vunpack.c.l.b16 %v275
        %v380 = vunpack.c.l.b16 %v276
        %v381 = vunpack.c.l.b16 %v277
        %v382 = vunpack.c.l.b16 %v278
        %v383 = vunpack.c.l.b16 %v279
        %v384 = vunpack.c.l.b16 %v280
        %v385 = vunpack.c.l.b16 %v281
        %v386 = vunpack.c.l.b16 %v282
        %v387 = vunpack.c.l.b16 %v283
        %v388 = vunpack.c.l.b16 %v284
        %v389 = vunpack.c.l.b16 %v285
        %v390 = vunpack.c.l.b16 %v286
        %v391 = vunpack.c.l.b16 %v287
        %v392 = vunpack.c.l.b16 %v288
        %v393 = vunpack.c.l.b16 %v289
        %v394 = vunpack.c.l.b16 %v290
        %v395 = vpack.c.b16 %v364, %v363
        %v396 = vpack.c.b16 %v366, %v365
        %v397 = vpack.c.b16 %v368, %v367
        %v398 = vpack.c.b16 %v370, %v369
        %v399 = vpack.c.b16 %v372, %v371
        %v400 = vpack.c.b16 %v374, %v373
        %v401 = vpack.c.b16 %v376, %v375
        %v402 = vpack.c.b16 %v378, %v377
        %v403 = vpack.c.b16 %v380, %v379
        %v404 = vpack.c.b16 %v382, %v381
        %v405 = vpack.c.b16 %v384, %v383
        %v406 = vpack.c.b16 %v386, %v385
        %v407 = vpack.c.b16 %v388, %v387
        %v408 = vpack.c.b16 %v390, %v389
        %v409 = vpack.c.b16 %v392, %v391
        %v410 = vpack.c.b16 %v394, %v393
        %427 = vmatprep.subr.bf16.mxu0 0
        %428 = vmatpush1.bf16.msra.mxu0 %v395
        %429 = vmatprep.subr.bf16.mxu0 0
        %430 = vmatpush1.bf16.msra.mxu0 %v396
        %431 = vmatprep.subr.bf16.mxu0 0
        %432 = vmatpush1.bf16.msra.mxu0 %v397
        %433 = vmatprep.subr.bf16.mxu0 0
        %434 = vmatpush1.bf16.msra.mxu0 %v398
        %435 = vmatprep.subr.bf16.mxu0 0
        %436 = vmatpush1.bf16.msra.mxu0 %v399
        %437 = vmatprep.subr.bf16.mxu0 0
        %438 = vmatpush1.bf16.msra.mxu0 %v400
        %439 = vmatprep.subr.bf16.mxu0 0
        %440 = vmatpush1.bf16.msra.mxu0 %v401
        %441 = vmatprep.subr.bf16.mxu0 0
        %442 = vmatpush1.bf16.msra.mxu0 %v402
        %443 = vmatprep.subr.bf16.mxu0 0
        %444 = vmatpush1.bf16.msra.mxu0 %v403
        %445 = vmatprep.subr.bf16.mxu0 0
        %446 = vmatpush1.bf16.msra.mxu0 %v404
        %447 = vmatprep.subr.bf16.mxu0 0
        %448 = vmatpush1.bf16.msra.mxu0 %v405
        %449 = vmatprep.subr.bf16.mxu0 0
        %450 = vmatpush1.bf16.msra.mxu0 %v406
        %451 = vmatprep.subr.bf16.mxu0 0
        %452 = vmatpush1.bf16.msra.mxu0 %v407
        %453 = vmatprep.subr.bf16.mxu0 0
        %454 = vmatpush1.bf16.msra.mxu0 %v408
        %455 = vmatprep.subr.bf16.mxu0 0
        %456 = vmatpush1.bf16.msra.mxu0 %v409
        %457 = vmatprep.subr.bf16.mxu0 0
        %458 = vmatpush1.bf16.msra.mxu0 %v410
        %459 = vmatprep.mubr.bf16.mxu0 %v316
        %460 = vmatmul.mubr.bf16.gmra.mrb[0].mxu0 %v315
        %v461 = vpop.f32.mrb[0].mxu0
        %v462 = vadd.f32 0.0, %v461
        %v463 = vpop.f32.mrb[0].mxu0
        %v464 = vpop.f32.mrb[0].mxu0
        %v465 = vadd.f32 0.0, %v464
        %v466 = vpop.f32.mrb[0].mxu0
        %467 = vmatprep.mubr.bf16.mxu0 %v318
        %468 = vmatmul.mubr.bf16.gmra.mrb[0].mxu0 %v317
        %v469 = vpop.f32.mrb[0].mxu0
        %v470 = vadd.f32 0.0, %v469
        %v471 = vpop.f32.mrb[0].mxu0
        %v472 = vpop.f32.mrb[0].mxu0
        %v473 = vadd.f32 0.0, %v472
        %v474 = vpop.f32.mrb[0].mxu0
        %475 = vmatprep.mubr.bf16.mxu0 %v320
        %476 = vmatmul.mubr.bf16.gmra.mrb[0].mxu0 %v319
        %v477 = vpop.f32.mrb[0].mxu0
        %v478 = vadd.f32 0.0, %v477
        %v479 = vpop.f32.mrb[0].mxu0
        %v480 = vpop.f32.mrb[0].mxu0
        %v481 = vadd.f32 0.0, %v480
        %v482 = vpop.f32.mrb[0].mxu0
        %483 = vmatprep.mubr.bf16.mxu0 %v322
        %484 = vmatmul.mubr.bf16.gmra.mrb[0].mxu0 %v321
        %v485 = vpop.f32.mrb[0].mxu0
        %v486 = vadd.f32 0.0, %v485
        %v487 = vpop.f32.mrb[0].mxu0
        %v488 = vpop.f32.mrb[0].mxu0
        %v489 = vadd.f32 0.0, %v488
        %v490 = vpop.f32.mrb[0].mxu0
        %491 = vdwg.mxu0
        %s492 = sld [smem:[#allocation2]]
        %v493 = vld [vmem:[%s3] sm:$0x1]
        %v495 = vlaneseq
        %v496 = vshrl.u32 %v495, 7
        %v497 = vsub.s32 0, %v496
        %v498 = vrot.slane %v493, %v497
        %v500 = vadd.f32 %v462, %v498
        %v501 = vadd.f32 %v465, %v498
        %v502 = vadd.f32 %v470, %v498
        %v503 = vadd.f32 %v473, %v498
        %v504 = vadd.f32 %v478, %v498
        %v505 = vadd.f32 %v481, %v498
        %v506 = vadd.f32 %v486, %v498
        %v507 = vadd.f32 %v489, %v498
        %v508 = vmax.f32 %v500, 1e-06
        %v509 = vmax.f32 %v501, 1e-06
        %v510 = vmax.f32 %v502, 1e-06
        %v511 = vmax.f32 %v503, 1e-06
        %v512 = vmax.f32 %v504, 1e-06
        %v513 = vmax.f32 %v505, 1e-06
        %v514 = vmax.f32 %v506, 1e-06
        %v515 = vmax.f32 %v507, 1e-06
        %v516 = vlog2.pop %v508
        %v517 = vmul.f32 %v516, 0.6931472
        %v518 = vlog2.pop %v509
        %v519 = vmul.f32 %v518, 0.6931472
        %v520 = vlog2.pop %v510
        %v521 = vmul.f32 %v520, 0.6931472
        %v522 = vlog2.pop %v511
        %v523 = vmul.f32 %v522, 0.6931472
        %v524 = vlog2.pop %v512
        %v525 = vmul.f32 %v524, 0.6931472
        %v526 = vlog2.pop %v513
        %v527 = vmul.f32 %v526, 0.6931472
        %v528 = vlog2.pop %v514
        %v529 = vmul.f32 %v528, 0.6931472
        %v530 = vlog2.pop %v515
        %v531 = vmul.f32 %v530, 0.6931472
        %v532 = vstv %s492
        %v533 = vmul.f32 %v517, %v532
        %v534 = vmul.f32 %v519, %v532
        %v535 = vmul.f32 %v521, %v532
        %v536 = vmul.f32 %v523, %v532
        %v537 = vmul.f32 %v525, %v532
        %v538 = vmul.f32 %v527, %v532
        %v539 = vmul.f32 %v529, %v532
        %v540 = vmul.f32 %v531, %v532
        %v541 = vmul.f32 %v533, 1.442695
        %v542 = vpow.pop %v541
        %v543 = vmul.f32 %v534, 1.442695
        %v544 = vpow.pop %v543
        %v545 = vmul.f32 %v535, 1.442695
        %v546 = vpow.pop %v545
        %v547 = vmul.f32 %v536, 1.442695
        %v548 = vpow.pop %v547
        %v549 = vmul.f32 %v537, 1.442695
        %v550 = vpow.pop %v549
        %v551 = vmul.f32 %v538, 1.442695
        %v552 = vpow.pop %v551
        %v553 = vmul.f32 %v539, 1.442695
        %v554 = vpow.pop %v553
        %v555 = vmul.f32 %v540, 1.442695
        %v556 = vpow.pop %v555
        %v557 = vadd.f32 %v542, %v544
        %v558 = vadd.f32 %v557, %v546
        %v559 = vadd.f32 %v558, %v548
        %v560 = vadd.f32 %v559, %v550
        %v561 = vadd.f32 %v560, %v552
        %v562 = vadd.f32 %v561, %v554
        %v563 = vadd.f32 %v562, %v556
        %v564 = vrot.slane %v563, 4
        %v565 = vadd.f32 %v563, %v564
        %v566 = vrot.slane %v565, 2
        %v567 = vadd.f32 %v565, %v566
        %v568 = vrot.slane %v567, 1
        %v569 = vadd.f32 %v567, %v568
        %v570 = vmul.f32 %v569, 0.015625
        %v571 = vlog2.pop %v570
        %v572 = vmul.f32 %v571, 0.6931472
        %v573 = vstv %s492
        %v574 = vrcp.pop %v573
        %s575 = vtos %v574
        %v576 = vstv %s575
        %v577 = vmul.f32 %v572, %v576
        %v578 = vmul.f32 %v577, 1.442695
        %v579 = vpow.pop %v578
        %v580 = vpack.c.bf16 %v579, %v579
        %v581 = vld [vmem:[%s4] sm:$0xf]
        %v582 = vld [vmem:[%s4 + $0x4] sm:$0xf]
        %v583 = vld [vmem:[%s4 + $0x8] sm:$0xf]
        %v584 = vld [vmem:[%s4 + $0xc] sm:$0xf]
        %v585 = vld [vmem:[%s4 + $0x10] sm:$0xf]
        %v586 = vld [vmem:[%s4 + $0x14] sm:$0xf]
        %v587 = vld [vmem:[%s4 + $0x18] sm:$0xf]
        %v588 = vld [vmem:[%s4 + $0x1c] sm:$0xf]
        %v589 = vld [vmem:[%s4 + $0x20] sm:$0xf]
        %v590 = vld [vmem:[%s4 + $0x24] sm:$0xf]
        %v591 = vld [vmem:[%s4 + $0x28] sm:$0xf]
        %v592 = vld [vmem:[%s4 + $0x2c] sm:$0xf]
        %v593 = vld [vmem:[%s4 + $0x30] sm:$0xf]
        %v594 = vld [vmem:[%s4 + $0x34] sm:$0xf]
        %v595 = vld [vmem:[%s4 + $0x38] sm:$0xf]
        %v596 = vld [vmem:[%s4 + $0x3c] sm:$0xf]
        %v597 = vld [vmem:[%s5] sm:$0x1]
        %v614 = vunpack.c.l.b16 %v581
        %v615 = vunpack.c.l.b16 %v582
        %v616 = vunpack.c.l.b16 %v583
        %v617 = vunpack.c.l.b16 %v584
        %v618 = vunpack.c.l.b16 %v585
        %v619 = vunpack.c.l.b16 %v586
        %v620 = vunpack.c.l.b16 %v587
        %v621 = vunpack.c.l.b16 %v588
        %v622 = vunpack.c.l.b16 %v589
        %v623 = vunpack.c.l.b16 %v590
        %v624 = vunpack.c.l.b16 %v591
        %v625 = vunpack.c.l.b16 %v592
        %v626 = vunpack.c.l.b16 %v593
        %v627 = vunpack.c.l.b16 %v594
        %v628 = vunpack.c.l.b16 %v595
        %v629 = vunpack.c.l.b16 %v596
        %v630 = vpack.c.b16 %v615, %v614
        %v631 = vpack.c.b16 %v617, %v616
        %v632 = vpack.c.b16 %v619, %v618
        %v633 = vpack.c.b16 %v621, %v620
        %v634 = vpack.c.b16 %v623, %v622
        %v635 = vpack.c.b16 %v625, %v624
        %v636 = vpack.c.b16 %v627, %v626
        %v637 = vpack.c.b16 %v629, %v628
        %646 = vmatprep.subr.bf16.mxu0 0
        %647 = vmatpush1.bf16.msra.mxu0 %v630
        %648 = vmatprep.subr.bf16.mxu0 0
        %649 = vmatpush1.bf16.msra.mxu0 %v631
        %650 = vmatprep.subr.bf16.mxu0 0
        %651 = vmatpush1.bf16.msra.mxu0 %v632
        %652 = vmatprep.subr.bf16.mxu0 0
        %653 = vmatpush1.bf16.msra.mxu0 %v633
        %654 = vmatprep.subr.bf16.mxu0 0
        %655 = vmatpush1.bf16.msra.mxu0 %v634
        %656 = vmatprep.subr.bf16.mxu0 0
        %657 = vmatpush1.bf16.msra.mxu0 %v635
        %658 = vmatprep.subr.bf16.mxu0 0
        %659 = vmatpush1.bf16.msra.mxu0 %v636
        %660 = vmatprep.subr.bf16.mxu0 0
        %661 = vmatpush1.bf16.msra.mxu0 %v637
        %662 = vmatprep.subr.bf16.mxu0 0
        %663 = vmatpush1.bf16.msra.mxu0 0
        %664 = vmatprep.subr.bf16.mxu0 0
        %665 = vmatpush1.bf16.msra.mxu0 0
        %666 = vmatprep.subr.bf16.mxu0 0
        %667 = vmatpush1.bf16.msra.mxu0 0
        %668 = vmatprep.subr.bf16.mxu0 0
        %669 = vmatpush1.bf16.msra.mxu0 0
        %670 = vmatprep.subr.bf16.mxu0 0
        %671 = vmatpush1.bf16.msra.mxu0 0
        %672 = vmatprep.subr.bf16.mxu0 0
        %673 = vmatpush1.bf16.msra.mxu0 0
        %674 = vmatprep.subr.bf16.mxu0 0
        %675 = vmatpush1.bf16.msra.mxu0 0
        %676 = vmatprep.subr.bf16.mxu0 0
        %677 = vmatpush1.bf16.msra.mxu0 0
        %678 = vmatprep.mubr.bf16.mxu0 0
        %679 = vmatmul.mubr.bf16.gmra.mrb[0].mxu0 %v580
        %v680 = vpop.f32.mrb[0].mxu0
        %v681 = vadd.f32 %v597, %v680
        %v682 = vpop.f32.mrb[0].mxu0
        %v683 = vpop.f32.mrb[0].mxu0
        %v684 = vpop.f32.mrb[0].mxu0
        %685 = vdwg.mxu0
        %686 = vst [vmem:[%s244] sm:$0x1] %v681
        %s687 = sand.u32 %s160, 1
        %s688 = scalar_lea.sflag [#allocation4], %s687
        %s689 = sand.u32 %s160, 1
        %s690 = scalar_lea.vmem [#allocation3], %s689
        // Predicated region
        $region45: #{fwd.1} parent=43 // pred_check
          %p691 = pneg %p170
        $region46: #{fwd.1} parent=43 // pred_check_branch
          %693 = sbr.rel (%p691) target = $region48
        $region47: #{fwd.1} parent=43 // pred_region
          %s695 = ssub.s32 16, 16
          %696 = vsyncadd %s688, %s695
          %s697 = smul.addr %s21, 16
          %s698 = scalar_lea.hbm %s6, %s697
          %s700 = sshll.u32 %s690, 4
          %s701 = int_to_ptr.vmem [resolvable:$true] %s700
          %703 = dma.vmem_to_hbm [thread:$0]  %s701, 16, %s698, %s688
        $region48: #{fwd.1} parent=43 // pred_fallthru
          _
      $region44: #{fwd.1} parent=5 // pred_fallthru
        _
      %p704 = scmp.le.s32.totalorder 2, %s16
      // Predicated region
      $region49: #{fwd.1} parent=5 // pred_check
        %p705 = pneg %p704
      $region50: #{fwd.1} parent=5 // pred_check_branch
        %707 = sbr.rel (%p705) target = $region52
      $region51: #{fwd.1} parent=5 // pred_region
        %s708 = ssub.s32 %s16, 2
        // Predicated region
        $region53: #{fwd.1} parent=51 // pred_check
          %p709 = pneg %p176
        $region54: #{fwd.1} parent=51 // pred_check_branch
          %711 = sbr.rel (%p709) target = $region56
        $region55: #{fwd.1} parent=51 // pred_region
          %s712 = sand.u32 %s161, 1
          %s713 = scalar_lea.sflag [#allocation4], %s712
          %s714 = sand.u32 %s161, 1
          %s715 = scalar_lea.vmem [#allocation3], %s714
          %716 = dma.done %s713, 16
        $region56: #{fwd.1} parent=51 // pred_fallthru
          _
      $region52: #{fwd.1} parent=5 // pred_fallthru
        _
    $region6: #{fwd.1} parent=1 // loop_footer
      %s20 = sadd.s32 1, %s16
    $region7: #{fwd.1} parent=1 // loop_footer_branch
      %15 = sbr.rel target = $region3
    $region8: #{fwd.1} parent=1 // loop_exit
      _
    %717 = vsyncpa [#allocation4], 1
    %s718 = scalar_lea.sflag [#allocation4], 1
    %719 = vsyncpa %s718, 1

</llo_original>
